<compile_context>
chip_gen: v7x
topology: tpu7x:2x2x1
jax: 0.10.0
libtpu: 0.0.40
codegen_flags: <defaults>
</compile_context>

<pallas_src>
import jax
import jax.numpy as jnp
from jax.experimental import pallas as pl
from jax.experimental.pallas import tpu as pltpu


# ----------------------------------------------------------------------------
# Fused kernel: conv-as-matmul + bias + ReLU + pooled-sum accumulate + linear.
# Grid = (B, HW // TILE_HW); batch outer ("parallel"), spatial inner ("arbitrary").
# ----------------------------------------------------------------------------
def _fused_kernel(p_ref, w1_ref, b1_ref, w2_ref, b2_ref, o_ref, acc_ref):
    # p_ref : (TILE_HW, K)   bf16 patches for one spatial tile of one batch
    # w1_ref: (K, Cout)      bf16 conv weights
    # b1_ref: (1, Cout)      f32 conv bias
    # w2_ref: (Cout, NC)     f32 classifier weights, pre-scaled by 1/HW
    # b2_ref: (1, NC)        f32 classifier bias
    # o_ref : (1, NC)        f32 logits for this batch
    # acc_ref: (1, Cout)     f32 running spatial sum of ReLU activations
    j = pl.program_id(1)

    @pl.when(j == 0)
    def _init():
        acc_ref[...] = jnp.zeros_like(acc_ref)

    # Conv as matmul on the MXU (bf16 operands, f32 accumulation) + bias + ReLU.
    act = jnp.dot(p_ref[...], w1_ref[...], preferred_element_type=jnp.float32)
    act = jnp.maximum(act + b1_ref[...], 0.0)                   # (TILE_HW, Cout)

    # Global-average-pool folded into the accumulator (scale lives in w2).
    acc_ref[...] += jnp.sum(act, axis=0, keepdims=True)         # (1, Cout)

    @pl.when(j == pl.num_programs(1) - 1)
    def _finalize():
        logits = jnp.dot(acc_ref[...], w2_ref[...],
                         preferred_element_type=jnp.float32)    # (1, NC)
        o_ref[...] = (logits + b2_ref[...]).astype(o_ref.dtype)


def fused_conv_pool_linear(patches, w1, b1, w2_scaled, b2, *, tile_hw):
    B, HW, K = patches.shape
    _, c_out = w1.shape
    _, nc = w2_scaled.shape
    assert HW % tile_hw == 0 and tile_hw % 8 == 0
    n_j = HW // tile_hw

    out = pl.pallas_call(
        _fused_kernel,
        out_shape=jax.ShapeDtypeStruct((B, 1, nc), jnp.float32),
        grid_spec=pltpu.PrefetchScalarGridSpec(
            num_scalar_prefetch=0,
            grid=(B, n_j),
            in_specs=[
                # Per-batch, per-spatial-tile patch block (double-buffered DMA).
                pl.BlockSpec((None, tile_hw, K), lambda b, j: (b, j, 0)),
                # Small weights / biases stay resident.
                pl.BlockSpec((K, c_out), lambda b, j: (0, 0)),
                pl.BlockSpec((1, c_out), lambda b, j: (0, 0)),
                pl.BlockSpec((c_out, nc), lambda b, j: (0, 0)),
                pl.BlockSpec((1, nc), lambda b, j: (0, 0)),
            ],
            # Output block is constant across the spatial axis -> stays resident
            # in VMEM until the last tile of each batch writes it.
            out_specs=pl.BlockSpec((None, 1, nc), lambda b, j: (b, 0, 0)),
            scratch_shapes=[pltpu.VMEM((1, c_out), jnp.float32)],
        ),
        compiler_params=pltpu.CompilerParams(
            dimension_semantics=("parallel", "arbitrary"),
            vmem_limit_bytes=32 * 1024 * 1024,
        ),
    )(patches, w1, b1, w2_scaled, b2)
    return out.reshape(B, nc)


# ----------------------------------------------------------------------------
# Glue: im2col patch extraction (plain JAX), parameter setup, full forward.
# ----------------------------------------------------------------------------
def im2col_same_3x3(x_nhwc):
    B, H, W, C = x_nhwc.shape
    xp = jnp.pad(x_nhwc, ((0, 0), (1, 1), (1, 1), (0, 0)))
    cols = []
    for di in range(3):
        for dj in range(3):
            cols.append(xp[:, di:di + H, dj:dj + W, :])
    patches = jnp.concatenate(cols, axis=-1)                    # (B, H, W, 9*C)
    return patches.reshape(B, H * W, 9 * C)


def init_params(key, c_in=4, c_out=32, num_classes=10):
    k1, k2, k3, k4 = jax.random.split(key, 4)
    # Conv2d weight in PyTorch layout (Cout, Cin, KH, KW)
    w_conv = jax.random.normal(k1, (c_out, c_in, 3, 3), jnp.float32) * 0.1
    b_conv = jax.random.normal(k2, (c_out,), jnp.float32) * 0.1
    # Linear weight in PyTorch layout (NC, Cout)
    w_fc = jax.random.normal(k3, (num_classes, c_out), jnp.float32) * 0.1
    b_fc = jax.random.normal(k4, (num_classes,), jnp.float32) * 0.1
    return w_conv, b_conv, w_fc, b_fc


def combined_model_forward(x_nchw, params, *, tile_hw=128):
    w_conv, b_conv, w_fc, b_fc = params
    B, C, H, W = x_nchw.shape
    c_out = w_conv.shape[0]
    num_classes = w_fc.shape[0]
    HW = H * W

    # NCHW -> NHWC and im2col ((kh, kw, cin) order along the contraction axis).
    x_nhwc = jnp.transpose(x_nchw, (0, 2, 3, 1))
    patches = im2col_same_3x3(x_nhwc)                           # (B, HW, 9*C)

    # Conv weight (Cout, Cin, KH, KW) -> (KH, KW, Cin, Cout) -> (9*C, Cout)
    w1 = jnp.transpose(w_conv, (2, 3, 1, 0)).reshape(9 * C, c_out)
    b1 = b_conv.reshape(1, c_out)

    # Linear weight (NC, Cout) -> (Cout, NC); fold the 1/HW mean-pool scale in.
    w2_scaled = jnp.transpose(w_fc) / float(HW)
    b2 = b_fc.reshape(1, num_classes)

    # bf16 MXU operands for the large matmul (f32 accumulation inside kernel).
    patches_bf16 = patches.astype(jnp.bfloat16)
    w1_bf16 = w1.astype(jnp.bfloat16)

    tile = min(tile_hw, HW)
    return fused_conv_pool_linear(patches_bf16, w1_bf16, b1, w2_scaled, b2,
                                  tile_hw=tile)


if __name__ == "__main__":
    key = jax.random.PRNGKey(0)
    kx, kp = jax.random.split(key)

    B, C, H, W = 2, 4, 16, 16
    x = jax.random.normal(kx, (B, C, H, W), jnp.float32)        # NCHW like PyTorch
    params = init_params(kp, c_in=C, c_out=32, num_classes=10)

    out = combined_model_forward(x, params)
    out = jax.block_until_ready(out)
    assert out.shape == (B, 10), out.shape

    # Pure-JAX f32 reference of the composed forward (module semantics).
    # Tolerance is 1e-2 because the kernel feeds the conv matmul with bf16
    # operands (expected deviation ~1e-3 at these magnitudes).
    w_conv, b_conv, w_fc, b_fc = params
    ref = jax.lax.conv_general_dilated(
        x, w_conv, (1, 1), "SAME",
        dimension_numbers=("NCHW", "OIHW", "NCHW"))
    ref = jnp.maximum(ref + b_conv[None, :, None, None], 0.0)
    ref = jnp.mean(ref, axis=(2, 3))                            # global avg pool
    ref = ref @ w_fc.T + b_fc
    assert jnp.allclose(out, ref, atol=1e-2, rtol=1e-2), (
        jnp.max(jnp.abs(out - ref)))

    print("KERNEL_OK")
</pallas_src>

<mosaic_0001>
module attributes {stable_mosaic.version = 11 : i64} {
  func.func @_fused_kernel(%arg0: i32, %arg1: i32, %arg2: memref<1x128x36xbf16, #tpu.memory_space<vmem>>, %arg3: memref<36x32xbf16, #tpu.memory_space<vmem>>, %arg4: memref<1x32xf32, #tpu.memory_space<vmem>>, %arg5: memref<32x10xf32, #tpu.memory_space<vmem>>, %arg6: memref<1x10xf32, #tpu.memory_space<vmem>>, %arg7: memref<1x1x10xf32, #tpu.memory_space<vmem>>, %arg8: memref<1x32xf32, #tpu.memory_space<vmem>>) attributes {dimension_semantics = [#tpu.dimension_semantics<parallel>, #tpu.dimension_semantics<arbitrary>], iteration_bounds = array<i64: 2, 2>, scalar_prefetch = 0 : i64, scratch_operands = 1 : i64, tpu.core_type = #tpu.core_type<tc>, window_params = [{transform_indices = @transform_0, window_bounds = array<i64: 1, 128, 36>}, {pipeline_mode = #tpu.pipeline_mode<synchronous>, transform_indices = @transform_1, window_bounds = array<i64: 36, 32>}, {pipeline_mode = #tpu.pipeline_mode<synchronous>, transform_indices = @transform_2, window_bounds = array<i64: 1, 32>}, {pipeline_mode = #tpu.pipeline_mode<synchronous>, transform_indices = @transform_3, window_bounds = array<i64: 32, 10>}, {pipeline_mode = #tpu.pipeline_mode<synchronous>, transform_indices = @transform_4, window_bounds = array<i64: 1, 10>}, {transform_indices = @transform_5, window_bounds = array<i64: 1, 1, 10>}]} {
    %c0_i32 = arith.constant 0 : i32
    %0 = arith.cmpi eq, %arg1, %c0_i32 : i32
    %1 = arith.extui %0 : i1 to i32
    %c0_i32_0 = arith.constant 0 : i32
    %2 = arith.cmpi ne, %1, %c0_i32_0 : i32
    scf.if %2 {
      %cst_14 = arith.constant 0.000000e+00 : f32
      %20 = vector.broadcast %cst_14 : f32 to vector<1x32xf32>
      %c0_15 = arith.constant 0 : index
      %c0_16 = arith.constant 0 : index
      %21 = vector.load %arg8[%c0_15, %c0_16] : memref<1x32xf32, #tpu.memory_space<vmem>>, vector<1x32xf32>
      tpu.vector_store %arg8[%c0_15, %c0_16], %20 {strides = array<i32>} : memref<1x32xf32, #tpu.memory_space<vmem>>, vector<1x32xf32>,
    } else {
    }
    %c0 = arith.constant 0 : index
    %c0_1 = arith.constant 0 : index
    %c0_2 = arith.constant 0 : index
    %3 = vector.load %arg2[%c0, %c0_1, %c0_2] : memref<1x128x36xbf16, #tpu.memory_space<vmem>>, vector<1x128x36xbf16>
    %4 = vector.shape_cast %3 : vector<1x128x36xbf16> to vector<128x36xbf16>
    %c0_3 = arith.constant 0 : index
    %c0_4 = arith.constant 0 : index
    %5 = vector.load %arg3[%c0_3, %c0_4] : memref<36x32xbf16, #tpu.memory_space<vmem>>, vector<36x32xbf16>
    %cst = arith.constant dense<0.000000e+00> : vector<128x32xf32>
    %6 = tpu.matmul %4, %5, %cst {dimension_numbers = #tpu.dot_dimension_numbers<[1], [0], [0], [1], [0, 0, 1, 1], [], []>} : vector<128x36xbf16>, vector<36x32xbf16>, vector<128x32xf32> -> vector<128x32xf32>
    %c0_5 = arith.constant 0 : index
    %c0_6 = arith.constant 0 : index
    %7 = vector.load %arg4[%c0_5, %c0_6] : memref<1x32xf32, #tpu.memory_space<vmem>>, vector<1x32xf32>
    %8 = vector.broadcast %7 : vector<1x32xf32> to vector<128x32xf32>
    %9 = arith.addf %6, %8 : vector<128x32xf32>
    %cst_7 = arith.constant 0.000000e+00 : f32
    %10 = vector.broadcast %cst_7 : f32 to vector<128x32xf32>
    %11 = arith.maximumf %9, %10 : vector<128x32xf32>
    %c0_8 = arith.constant 0 : index
    %c0_9 = arith.constant 0 : index
    %12 = vector.load %arg8[%c0_8, %c0_9] : memref<1x32xf32, #tpu.memory_space<vmem>>, vector<1x32xf32>
    %cst_10 = arith.constant dense<0.000000e+00> : vector<32xf32>
    %13 = vector.multi_reduction <add>, %11, %cst_10 [0] : vector<128x32xf32> to vector<32xf32>
    %14 = vector.shape_cast %13 : vector<32xf32> to vector<1x32xf32>
    %15 = arith.addf %12, %14 : vector<1x32xf32>
    %c0_11 = arith.constant 0 : index
    %c0_12 = arith.constant 0 : index
    %16 = vector.load %arg8[%c0_11, %c0_12] : memref<1x32xf32, #tpu.memory_space<vmem>>, vector<1x32xf32>
    tpu.vector_store %arg8[%c0_11, %c0_12], %15 {strides = array<i32>} : memref<1x32xf32, #tpu.memory_space<vmem>>, vector<1x32xf32>,
    %c1_i32 = arith.constant 1 : i32
    %17 = arith.cmpi eq, %arg1, %c1_i32 : i32
    %18 = arith.extui %17 : i1 to i32
    %c0_i32_13 = arith.constant 0 : i32
    %19 = arith.cmpi ne, %18, %c0_i32_13 : i32
    scf.if %19 {
      %c0_14 = arith.constant 0 : index
      %c0_15 = arith.constant 0 : index
      %20 = vector.load %arg8[%c0_14, %c0_15] : memref<1x32xf32, #tpu.memory_space<vmem>>, vector<1x32xf32>
      %c0_16 = arith.constant 0 : index
      %c0_17 = arith.constant 0 : index
      %21 = vector.load %arg5[%c0_16, %c0_17] : memref<32x10xf32, #tpu.memory_space<vmem>>, vector<32x10xf32>
      %cst_18 = arith.constant dense<0.000000e+00> : vector<1x10xf32>
      %22 = tpu.matmul %20, %21, %cst_18 {dimension_numbers = #tpu.dot_dimension_numbers<[1], [0], [0], [1], [0, 0, 1, 1], [], []>} : vector<1x32xf32>, vector<32x10xf32>, vector<1x10xf32> -> vector<1x10xf32>
      %c0_19 = arith.constant 0 : index
      %c0_20 = arith.constant 0 : index
      %23 = vector.load %arg6[%c0_19, %c0_20] : memref<1x10xf32, #tpu.memory_space<vmem>>, vector<1x10xf32>
      %24 = arith.addf %22, %23 : vector<1x10xf32>
      %c0_21 = arith.constant 0 : index
      %c0_22 = arith.constant 0 : index
      %c0_23 = arith.constant 0 : index
      %25 = vector.load %arg7[%c0_21, %c0_22, %c0_23] : memref<1x1x10xf32, #tpu.memory_space<vmem>>, vector<1x1x10xf32>
      %26 = vector.shape_cast %25 : vector<1x1x10xf32> to vector<1x10xf32>
      %27 = vector.shape_cast %24 : vector<1x10xf32> to vector<1x1x10xf32>
      tpu.vector_store %arg7[%c0_21, %c0_22, %c0_23], %27 {strides = array<i32>} : memref<1x1x10xf32, #tpu.memory_space<vmem>>, vector<1x1x10xf32>,
    } else {
    }
    return
  }
  func.func @transform_0(%arg0: i32, %arg1: i32) -> (i32, i32, i32) {
    %c0_i32 = arith.constant 0 : i32
    %c0_i32_0 = arith.constant 0 : i32
    return %arg0, %arg1, %c0_i32 : i32, i32, i32
  }
  func.func @transform_1(%arg0: i32, %arg1: i32) -> (i32, i32) {
    %c0_i32 = arith.constant 0 : i32
    %c0_i32_0 = arith.constant 0 : i32
    %c0_i32_1 = arith.constant 0 : i32
    return %c0_i32, %c0_i32_0 : i32, i32
  }
  func.func @transform_2(%arg0: i32, %arg1: i32) -> (i32, i32) {
    %c0_i32 = arith.constant 0 : i32
    %c0_i32_0 = arith.constant 0 : i32
    %c0_i32_1 = arith.constant 0 : i32
    return %c0_i32, %c0_i32_0 : i32, i32
  }
  func.func @transform_3(%arg0: i32, %arg1: i32) -> (i32, i32) {
    %c0_i32 = arith.constant 0 : i32
    %c0_i32_0 = arith.constant 0 : i32
    %c0_i32_1 = arith.constant 0 : i32
    return %c0_i32, %c0_i32_0 : i32, i32
  }
  func.func @transform_4(%arg0: i32, %arg1: i32) -> (i32, i32) {
    %c0_i32 = arith.constant 0 : i32
    %c0_i32_0 = arith.constant 0 : i32
    %c0_i32_1 = arith.constant 0 : i32
    return %c0_i32, %c0_i32_0 : i32, i32
  }
  func.func @transform_5(%arg0: i32, %arg1: i32) -> (i32, i32, i32) {
    %c0_i32 = arith.constant 0 : i32
    %c0_i32_0 = arith.constant 0 : i32
    %c0_i32_1 = arith.constant 0 : i32
    return %arg0, %c0_i32, %c0_i32_0 : i32, i32, i32
  }
}

</mosaic_0001>

<llo_original>
// kernel: tpu_custom_call.1
$region0: #{tpu_custom_call.1}
  #allocation0 [shape = 'u32[]', space=smem, size = 0x4, offset = 0x4, fixed_abs, tag = 'smem constant byte address 0x4 - core index']
  #allocation1 [shape = 'u32[144,128]{1,0:T(1,128)}', space=vmem, size = 0x12000, scoped, tag = 'internal scratch']
  #allocation2 [shape = 'f32[1,32]{1,0:T(1,128)}', space=vmem, size = 0x200, scoped, tag = 'scratch operand']
  %s0 = inlined_call_operand.vmem [shape: bf16[2,256,36], index: 0, kind: input, shape index: {}]
  %s1 = inlined_call_operand.vmem [shape: bf16[36,32], index: 1, kind: input, shape index: {}]
  %s2 = inlined_call_operand.vmem [shape: f32[1,32], index: 2, kind: input, shape index: {}]
  %s3 = inlined_call_operand.vmem [shape: f32[32,10], index: 3, kind: input, shape index: {}]
  %s4 = inlined_call_operand.vmem [shape: f32[1,10], index: 4, kind: input, shape index: {}]
  %s5 = inlined_call_operand.hbm [shape: f32[2,1,10], index: 5, kind: output, shape index: {}]
  %s6 = sld [smem:[#allocation0]]
  $region61: #{tpu_custom_call.1} parent=0
    _
  %s8 = ssub.s32 1, %s6
  %s9 = scalar_select 0, %s8, %s6
  $region1: #{tpu_custom_call.1} parent=0
    #allocation3 [shape = 'u8[1024]{0}', space=vmem, size = 0x400, scoped, tag = 'output window, operand 0']
    #allocation4 [shape = 's32[2]{0}', space=sflag, size = 0x8, scoped, tag = 'scoped memory for tpu_custom_call.1']
    %10 = vsyncpa [#allocation4], 0
    %s11 = scalar_lea.sflag [#allocation4], 1
    %12 = vsyncpa %s11, 0
    loop: start=0, step=1, limit=6
    $region2: #{tpu_custom_call.1} parent=1 // loop_pre_header
      _
    $region3: #{tpu_custom_call.1} parent=1 // loop_header
      %s14 = sphi 0, %s18
      %p15 = scmp.ge.s32.totalorder %s14, 6
      %s21 = sphi 0, %s33
      %s22 = sphi 0, %s29
      %s23 = sphi 0, %s21
      %s24 = sphi 0, %s22
      %s25 = sphi 0, %s23
      %s26 = sphi 0, %s24
      %s38 = sphi 0, %s40
      %s41 = sphi 0, %s38
      %s42 = sphi 0, %s41
      %s58 = sphi 0, %s42
      %s62 = sphi 0, %s62
      %s64 = sphi 0, %s62
      %s65 = sphi 0, %s64
      %s79 = sphi 0, %s65
      %s83 = sphi 0, %s83
      %s85 = sphi 0, %s83
      %s86 = sphi 0, %s85
      %s100 = sphi 0, %s86
      %s104 = sphi 0, %s104
      %s106 = sphi 0, %s104
      %s107 = sphi 0, %s106
      %s121 = sphi 0, %s107
      %s125 = sphi 0, %s125
      %s127 = sphi 0, %s125
      %s128 = sphi 0, %s127
      %s142 = sphi 0, %s128
      %s148 = sphi 0, %s150
      %s151 = sphi 0, %s148
      %s152 = sphi 0, %s151
      %s168 = sphi 0, %s152
    $region4: #{tpu_custom_call.1} parent=1 // loop_header_branch
      %17 = sbr.rel (%p15) target = $region8
    $region5: #{tpu_custom_call.1} parent=1 // loop_body
      %s19 = ssub.s32 %s14, 1
      %s20 = ssub.s32 %s14, 2
      %s27 = sadd.s32 1, %s22
      %p28 = scmp.ge.s32.totalorder %s27, 2
      %s29 = scalar_select %p28, 0, %s27
      %s30 = sadd.s32 1, %s21
      %s31 = scalar_select %p28, %s30, %s21
      %p32 = scmp.ge.s32.totalorder %s31, 2
      %s33 = scalar_select %p32, 0, %s31
      %s34 = ssub.s32 %s21, %s33
      %s35 = ssub.s32 %s22, %s29
      %s36 = sor.u32 %s34, %s35
      %p37 = scmp.eq.s32.totalorder %s36, 0
      %s39 = sadd.s32 %s38, 1
      %s40 = scalar_select %p37, %s38, %s39
      %p43 = pneg %p37
      %p44 = scmp.eq.s32.totalorder %s14, 3
      %p45 = por %p43, %p44
      %p46 = scmp.ne.s32.totalorder %s38, %s41
      %p47 = scmp.eq.s32.totalorder %s14, 0
      %p48 = por %p46, %p47
      %p49 = scmp.ne.s32.totalorder %s38, %s41
      %p50 = scmp.eq.s32.totalorder %s19, 3
      %p51 = por %p49, %p50
      %p52 = scmp.ne.s32.totalorder %s41, %s42
      %p53 = scmp.eq.s32.totalorder %s19, 0
      %p54 = por %p52, %p53
      %p55 = scmp.ne.s32.totalorder %s41, %s42
      %p56 = scmp.eq.s32.totalorder %s20, 3
      %p57 = por %p55, %p56
      %p59 = scmp.ne.s32.totalorder %s42, %s58
      %p60 = scmp.eq.s32.totalorder %s20, 0
      %p61 = por %p59, %p60
      %s63 = sadd.s32 %s62, 1
      %p66 = scmp.eq.s32.totalorder %s14, 3
      %p67 = scmp.ne.s32.totalorder %s62, %s64
      %p68 = scmp.eq.s32.totalorder %s14, 0
      %p69 = por %p67, %p68
      %p70 = scmp.ne.s32.totalorder %s62, %s64
      %p71 = scmp.eq.s32.totalorder %s19, 3
      %p72 = por %p70, %p71
      %p73 = scmp.ne.s32.totalorder %s64, %s65
      %p74 = scmp.eq.s32.totalorder %s19, 0
      %p75 = por %p73, %p74
      %p76 = scmp.ne.s32.totalorder %s64, %s65
      %p77 = scmp.eq.s32.totalorder %s20, 3
      %p78 = por %p76, %p77
      %p80 = scmp.ne.s32.totalorder %s65, %s79
      %p81 = scmp.eq.s32.totalorder %s20, 0
      %p82 = por %p80, %p81
      %s84 = sadd.s32 %s83, 1
      %p87 = scmp.eq.s32.totalorder %s14, 3
      %p88 = scmp.ne.s32.totalorder %s83, %s85
      %p89 = scmp.eq.s32.totalorder %s14, 0
      %p90 = por %p88, %p89
      %p91 = scmp.ne.s32.totalorder %s83, %s85
      %p92 = scmp.eq.s32.totalorder %s19, 3
      %p93 = por %p91, %p92
      %p94 = scmp.ne.s32.totalorder %s85, %s86
      %p95 = scmp.eq.s32.totalorder %s19, 0
      %p96 = por %p94, %p95
      %p97 = scmp.ne.s32.totalorder %s85, %s86
      %p98 = scmp.eq.s32.totalorder %s20, 3
      %p99 = por %p97, %p98
      %p101 = scmp.ne.s32.totalorder %s86, %s100
      %p102 = scmp.eq.s32.totalorder %s20, 0
      %p103 = por %p101, %p102
      %s105 = sadd.s32 %s104, 1
      %p108 = scmp.eq.s32.totalorder %s14, 3
      %p109 = scmp.ne.s32.totalorder %s104, %s106
      %p110 = scmp.eq.s32.totalorder %s14, 0
      %p111 = por %p109, %p110
      %p112 = scmp.ne.s32.totalorder %s104, %s106
      %p113 = scmp.eq.s32.totalorder %s19, 3
      %p114 = por %p112, %p113
      %p115 = scmp.ne.s32.totalorder %s106, %s107
      %p116 = scmp.eq.s32.totalorder %s19, 0
      %p117 = por %p115, %p116
      %p118 = scmp.ne.s32.totalorder %s106, %s107
      %p119 = scmp.eq.s32.totalorder %s20, 3
      %p120 = por %p118, %p119
      %p122 = scmp.ne.s32.totalorder %s107, %s121
      %p123 = scmp.eq.s32.totalorder %s20, 0
      %p124 = por %p122, %p123
      %s126 = sadd.s32 %s125, 1
      %p129 = scmp.eq.s32.totalorder %s14, 3
      %p130 = scmp.ne.s32.totalorder %s125, %s127
      %p131 = scmp.eq.s32.totalorder %s14, 0
      %p132 = por %p130, %p131
      %p133 = scmp.ne.s32.totalorder %s125, %s127
      %p134 = scmp.eq.s32.totalorder %s19, 3
      %p135 = por %p133, %p134
      %p136 = scmp.ne.s32.totalorder %s127, %s128
      %p137 = scmp.eq.s32.totalorder %s19, 0
      %p138 = por %p136, %p137
      %p139 = scmp.ne.s32.totalorder %s127, %s128
      %p140 = scmp.eq.s32.totalorder %s20, 3
      %p141 = por %p139, %p140
      %p143 = scmp.ne.s32.totalorder %s128, %s142
      %p144 = scmp.eq.s32.totalorder %s20, 0
      %p145 = por %p143, %p144
      %s146 = ssub.s32 %s21, %s33
      %p147 = scmp.eq.s32.totalorder %s146, 0
      %s149 = sadd.s32 %s148, 1
      %s150 = scalar_select %p147, %s148, %s149
      %p153 = pneg %p147
      %p154 = scmp.eq.s32.totalorder %s14, 3
      %p155 = por %p153, %p154
      %p156 = scmp.ne.s32.totalorder %s148, %s151
      %p157 = scmp.eq.s32.totalorder %s14, 0
      %p158 = por %p156, %p157
      %p159 = scmp.ne.s32.totalorder %s148, %s151
      %p160 = scmp.eq.s32.totalorder %s19, 3
      %p161 = por %p159, %p160
      %p162 = scmp.ne.s32.totalorder %s151, %s152
      %p163 = scmp.eq.s32.totalorder %s19, 0
      %p164 = por %p162, %p163
      %p165 = scmp.ne.s32.totalorder %s151, %s152
      %p166 = scmp.eq.s32.totalorder %s20, 3
      %p167 = por %p165, %p166
      %p169 = scmp.ne.s32.totalorder %s152, %s168
      %p170 = scmp.eq.s32.totalorder %s20, 0
      %p171 = por %p169, %p170
      %p172 = scmp.le.s32.totalorder 1, %s14
      %p173 = scmp.lt.s32.totalorder %s14, 5
      %p174 = pnand %p172, %p173
      %p175 = pneg %p174
      // Predicated region
      $region9: #{tpu_custom_call.1} parent=5 // pred_check
        _
      $region10: #{tpu_custom_call.1} parent=5 // pred_check_branch
        %177 = sbr.rel (%p174) target = $region12
      $region11: #{tpu_custom_call.1} parent=5 // pred_region
        %s178 = ssub.s32 %s14, 1
        // Predicated region
        $region13: #{tpu_custom_call.1} parent=11 // pred_check
          %p179 = pneg %p75
        $region14: #{tpu_custom_call.1} parent=11 // pred_check_branch
          %181 = sbr.rel (%p179) target = $region16
        $region15: #{tpu_custom_call.1} parent=11 // pred_region
          _
        $region16: #{tpu_custom_call.1} parent=11 // pred_fallthru
          _
        // Predicated region
        $region17: #{tpu_custom_call.1} parent=11 // pred_check
          %p182 = pneg %p96
        $region18: #{tpu_custom_call.1} parent=11 // pred_check_branch
          %184 = sbr.rel (%p182) target = $region20
        $region19: #{tpu_custom_call.1} parent=11 // pred_region
          _
        $region20: #{tpu_custom_call.1} parent=11 // pred_fallthru
          _
        // Predicated region
        $region21: #{tpu_custom_call.1} parent=11 // pred_check
          %p185 = pneg %p117
        $region22: #{tpu_custom_call.1} parent=11 // pred_check_branch
          %187 = sbr.rel (%p185) target = $region24
        $region23: #{tpu_custom_call.1} parent=11 // pred_region
          _
        $region24: #{tpu_custom_call.1} parent=11 // pred_fallthru
          _
        // Predicated region
        $region25: #{tpu_custom_call.1} parent=11 // pred_check
          %p188 = pneg %p138
        $region26: #{tpu_custom_call.1} parent=11 // pred_check_branch
          %190 = sbr.rel (%p188) target = $region28
        $region27: #{tpu_custom_call.1} parent=11 // pred_region
          _
        $region28: #{tpu_custom_call.1} parent=11 // pred_fallthru
          _
      $region12: #{tpu_custom_call.1} parent=5 // pred_fallthru
        _
      %p191 = scmp.lt.s32.totalorder %s14, 4
      // Predicated region
      $region29: #{tpu_custom_call.1} parent=5 // pred_check
        %p192 = pneg %p191
      $region30: #{tpu_custom_call.1} parent=5 // pred_check_branch
        %194 = sbr.rel (%p192) target = $region32
      $region31: #{tpu_custom_call.1} parent=5 // pred_region
        // Predicated region
        $region33: #{tpu_custom_call.1} parent=31 // pred_check
          %p195 = pneg %p48
        $region34: #{tpu_custom_call.1} parent=31 // pred_check_branch
          %197 = sbr.rel (%p195) target = $region36
        $region35: #{tpu_custom_call.1} parent=31 // pred_region
          %s198 = smul.u32 16, %s22
          %p199 = scmp.lt.s32.totalorder %s21, 1
          %s200 = scalar_select %p199, %s21, 1
          %p201 = scmp.lt.s32.totalorder %s198, 31
          %s202 = scalar_select %p201, %s198, 31
          %s203 = smul.addr %s200, 32
          %s204 = sadd.s32 %s202, %s203
          %s205 = smul.addr %s204, 4
          %s206 = scalar_lea.vmem %s0, %s205
          %s207 = smul.u32 16, %s22
        $region36: #{tpu_custom_call.1} parent=31 // pred_fallthru
          _
      $region32: #{tpu_custom_call.1} parent=5 // pred_fallthru
        _
      %p208 = scmp.le.s32.totalorder 1, %s14
      %p209 = scmp.lt.s32.totalorder %s14, 5
      %p210 = pnand %p208, %p209
      %p211 = pneg %p210
      // Predicated region
      $region37: #{tpu_custom_call.1} parent=5 // pred_check
        _
      $region38: #{tpu_custom_call.1} parent=5 // pred_check_branch
        %213 = sbr.rel (%p210) target = $region40
      $region39: #{tpu_custom_call.1} parent=5 // pred_region
        %s214 = ssub.s32 %s14, 1
        %s215 = smul.u32 16, %s24
        %p216 = scmp.lt.s32.totalorder %s23, 1
        %s217 = scalar_select %p216, %s23, 1
        %p218 = scmp.lt.s32.totalorder %s215, 31
        %s219 = scalar_select %p218, %s215, 31
        %s220 = smul.addr %s217, 32
        %s221 = sadd.s32 %s219, %s220
        %s222 = smul.addr %s221, 4
        %s223 = scalar_lea.vmem %s0, %s222
        %p224 = pneg %p54
        %p225 = pneg %p51
        %p226 = pneg %p75
        %p227 = pneg %p72
        %p228 = pneg %p96
        %p229 = pneg %p93
        %p230 = pneg %p117
        %p231 = pneg %p114
        %p232 = pneg %p138
        %p233 = pneg %p135
        %p234 = pneg %p164
        %p235 = pneg %p161
        %s236 = sand.u32 %s151, 1
        %s237 = scalar_lea.sflag [#allocation4], %s236
        %s238 = sand.u32 %s151, 1
        %s239 = scalar_lea.vmem [#allocation3], %s238
        %s240 = smul.u32 16, %s24
        %p241 = scmp.lt.s32.totalorder %s23, 1
        %s242 = scalar_select %p241, %s23, 1
        %p243 = scmp.lt.s32.totalorder %s240, 31
        %s244 = scalar_select %p243, %s240, 31
        %s245 = smul.addr %s242, 32
        %s246 = sadd.s32 %s244, %s245
        %s247 = smul.addr %s246, 4
        %s248 = scalar_lea.vmem %s0, %s247
        %s249 = smul.u32 16, %s24
        %p251 = scmp.eq.s32.totalorder %s24, 0
        // Predicated region
        $region41: #{tpu_custom_call.1} parent=39 // pred_check
          %p252 = pneg %p251
        $region42: #{tpu_custom_call.1} parent=39 // pred_check_branch
          %254 = sbr.rel (%p252) target = $region44
        $region43: #{tpu_custom_call.1} parent=39 // pred_region
          %vm255 = vcmask 253952
          %256 = vst.msk [vmem:[#allocation2] sm:$0x1] %vm255, 0.0
        $region44: #{tpu_custom_call.1} parent=39 // pred_fallthru
          _
        %v257 = vld [vmem:[%s248] sm:$0xf]
        %v258 = vld [vmem:[%s248 + $0x4] sm:$0xf]
        %v259 = vld [vmem:[%s248 + $0x8] sm:$0xf]
        %v260 = vld [vmem:[%s248 + $0xc] sm:$0xf]
        %v261 = vld [vmem:[%s248 + $0x10] sm:$0xf]
        %v262 = vld [vmem:[%s248 + $0x14] sm:$0xf]
        %v263 = vld [vmem:[%s248 + $0x18] sm:$0xf]
        %v264 = vld [vmem:[%s248 + $0x1c] sm:$0xf]
        %v265 = vld [vmem:[%s248 + $0x20] sm:$0xf]
        %v266 = vld [vmem:[%s248 + $0x24] sm:$0xf]
        %v267 = vld [vmem:[%s248 + $0x28] sm:$0xf]
        %v268 = vld [vmem:[%s248 + $0x2c] sm:$0xf]
        %v269 = vld [vmem:[%s248 + $0x30] sm:$0xf]
        %v270 = vld [vmem:[%s248 + $0x34] sm:$0xf]
        %v271 = vld [vmem:[%s248 + $0x38] sm:$0xf]
        %v272 = vld [vmem:[%s248 + $0x3c] sm:$0xf]
        %v273 = vld [vmem:[%s1] sm:$0xf]
        %v274 = vld [vmem:[%s1 + $0x4] sm:$0xf]
        %v275 = vld [vmem:[%s1 + $0x8] sm:$0xf]
        %v276 = vld [vmem:[%s1 + $0xc] sm:$0xf]
        %v277 = vld [vmem:[%s1 + $0x10] sm:$0x3]
        %v278 = vld [vmem:[%s2] sm:$0x1]
        %v280 = vlaneseq
        %v281 = vshrl.u32 %v280, 7
        %v282 = vsub.s32 0, %v281
        %v283 = vrot.slane %v278, %v282
        %v301 = vunpack.c.l.b16 %v257
        %v302 = vunpack.c.l.b16 %v258
        %v303 = vunpack.c.l.b16 %v259
        %v304 = vunpack.c.l.b16 %v260
        %v305 = vunpack.c.l.b16 %v261
        %v306 = vunpack.c.l.b16 %v262
        %v307 = vunpack.c.l.b16 %v263
        %v308 = vunpack.c.l.b16 %v264
        %v309 = vunpack.c.l.b16 %v265
        %v310 = vunpack.c.l.b16 %v266
        %v311 = vunpack.c.l.b16 %v267
        %v312 = vunpack.c.l.b16 %v268
        %v313 = vunpack.c.l.b16 %v269
        %v314 = vunpack.c.l.b16 %v270
        %v315 = vunpack.c.l.b16 %v271
        %v316 = vunpack.c.l.b16 %v272
        %v317 = vpack.c.b16 %v302, %v301
        %v318 = vpack.c.b16 %v304, %v303
        %v319 = vpack.c.b16 %v306, %v305
        %v320 = vpack.c.b16 %v308, %v307
        %v321 = vpack.c.b16 %v310, %v309
        %v322 = vpack.c.b16 %v312, %v311
        %v323 = vpack.c.b16 %v314, %v313
        %v324 = vpack.c.b16 %v316, %v315
        %v330 = vunpack.c.l.b16 %v273
        %v331 = vunpack.c.l.b16 %v274
        %v332 = vunpack.c.l.b16 %v275
        %v333 = vunpack.c.l.b16 %v276
        %v334 = vunpack.c.l.b16 %v277
        %v335 = vpack.c.b16 %v331, %v330
        %v336 = vpack.c.b16 %v333, %v332
        %v337 = vpack.c.b16 %v334, %v334
        %vm340 = vcmask 293888
        %v342 = vsel %vm340, %v317, 0
        %v345 = vsel %vm340, %v318, 0
        %v348 = vsel %vm340, %v319, 0
        %v351 = vsel %vm340, %v320, 0
        %v354 = vsel %vm340, %v321, 0
        %v357 = vsel %vm340, %v322, 0
        %v360 = vsel %vm340, %v323, 0
        %v363 = vsel %vm340, %v324, 0
        %vm365 = vcmask 1041408
        %v367 = vsel %vm365, %v337, 0
        %369 = vmatprep.subr.bf16.mxu0 0
        %370 = vmatpush1.bf16.msra.mxu0 %v335
        %371 = vmatprep.subr.bf16.mxu0 0
        %372 = vmatpush1.bf16.msra.mxu0 %v336
        %373 = vmatprep.subr.bf16.mxu0 0
        %374 = vmatpush1.bf16.msra.mxu0 %v367
        %375 = vmatprep.subr.bf16.mxu0 0
        %376 = vmatpush1.bf16.msra.mxu0 0
        %377 = vmatprep.subr.bf16.mxu0 0
        %378 = vmatpush1.bf16.msra.mxu0 0
        %379 = vmatprep.subr.bf16.mxu0 0
        %380 = vmatpush1.bf16.msra.mxu0 0
        %381 = vmatprep.subr.bf16.mxu0 0
        %382 = vmatpush1.bf16.msra.mxu0 0
        %383 = vmatprep.subr.bf16.mxu0 0
        %384 = vmatpush1.bf16.msra.mxu0 0
        %385 = vmatprep.subr.bf16.mxu0 0
        %386 = vmatpush1.bf16.msra.mxu0 0
        %387 = vmatprep.subr.bf16.mxu0 0
        %388 = vmatpush1.bf16.msra.mxu0 0
        %389 = vmatprep.subr.bf16.mxu0 0
        %390 = vmatpush1.bf16.msra.mxu0 0
        %391 = vmatprep.subr.bf16.mxu0 0
        %392 = vmatpush1.bf16.msra.mxu0 0
        %393 = vmatprep.subr.bf16.mxu0 0
        %394 = vmatpush1.bf16.msra.mxu0 0
        %395 = vmatprep.subr.bf16.mxu0 0
        %396 = vmatpush1.bf16.msra.mxu0 0
        %397 = vmatprep.subr.bf16.mxu0 0
        %398 = vmatpush1.bf16.msra.mxu0 0
        %399 = vmatprep.subr.bf16.mxu0 0
        %400 = vmatpush1.bf16.msra.mxu0 0
        %401 = vmatprep.mubr.bf16.mxu0 0
        %402 = vmatmul.mubr.bf16.gmra.mrb[0].mxu0 %v342
        %v403 = vpop.f32.mrb[0].mxu0
        %v404 = vadd.f32 %v283, %v403
        %v405 = vpop.f32.mrb[0].mxu0
        %v406 = vpop.f32.mrb[0].mxu0
        %v407 = vadd.f32 %v283, %v406
        %v408 = vpop.f32.mrb[0].mxu0
        %409 = vmatprep.mubr.bf16.mxu0 0
        %410 = vmatmul.mubr.bf16.gmra.mrb[0].mxu0 %v345
        %v411 = vpop.f32.mrb[0].mxu0
        %v412 = vadd.f32 %v283, %v411
        %v413 = vpop.f32.mrb[0].mxu0
        %v414 = vpop.f32.mrb[0].mxu0
        %v415 = vadd.f32 %v283, %v414
        %v416 = vpop.f32.mrb[0].mxu0
        %417 = vmatprep.mubr.bf16.mxu0 0
        %418 = vmatmul.mubr.bf16.gmra.mrb[0].mxu0 %v348
        %v419 = vpop.f32.mrb[0].mxu0
        %v420 = vadd.f32 %v283, %v419
        %v421 = vpop.f32.mrb[0].mxu0
        %v422 = vpop.f32.mrb[0].mxu0
        %v423 = vadd.f32 %v283, %v422
        %v424 = vpop.f32.mrb[0].mxu0
        %425 = vmatprep.mubr.bf16.mxu0 0
        %426 = vmatmul.mubr.bf16.gmra.mrb[0].mxu0 %v351
        %v427 = vpop.f32.mrb[0].mxu0
        %v428 = vadd.f32 %v283, %v427
        %v429 = vpop.f32.mrb[0].mxu0
        %v430 = vpop.f32.mrb[0].mxu0
        %v431 = vadd.f32 %v283, %v430
        %v432 = vpop.f32.mrb[0].mxu0
        %433 = vmatprep.mubr.bf16.mxu0 0
        %434 = vmatmul.mubr.bf16.gmra.mrb[0].mxu0 %v354
        %v435 = vpop.f32.mrb[0].mxu0
        %v436 = vadd.f32 %v283, %v435
        %v437 = vpop.f32.mrb[0].mxu0
        %v438 = vpop.f32.mrb[0].mxu0
        %v439 = vadd.f32 %v283, %v438
        %v440 = vpop.f32.mrb[0].mxu0
        %441 = vmatprep.mubr.bf16.mxu0 0
        %442 = vmatmul.mubr.bf16.gmra.mrb[0].mxu0 %v357
        %v443 = vpop.f32.mrb[0].mxu0
        %v444 = vadd.f32 %v283, %v443
        %v445 = vpop.f32.mrb[0].mxu0
        %v446 = vpop.f32.mrb[0].mxu0
        %v447 = vadd.f32 %v283, %v446
        %v448 = vpop.f32.mrb[0].mxu0
        %449 = vmatprep.mubr.bf16.mxu0 0
        %450 = vmatmul.mubr.bf16.gmra.mrb[0].mxu0 %v360
        %v451 = vpop.f32.mrb[0].mxu0
        %v452 = vadd.f32 %v283, %v451
        %v453 = vpop.f32.mrb[0].mxu0
        %v454 = vpop.f32.mrb[0].mxu0
        %v455 = vadd.f32 %v283, %v454
        %v456 = vpop.f32.mrb[0].mxu0
        %457 = vmatprep.mubr.bf16.mxu0 0
        %458 = vmatmul.mubr.bf16.gmra.mrb[0].mxu0 %v363
        %v459 = vpop.f32.mrb[0].mxu0
        %v460 = vadd.f32 %v283, %v459
        %v461 = vpop.f32.mrb[0].mxu0
        %v462 = vpop.f32.mrb[0].mxu0
        %v463 = vadd.f32 %v283, %v462
        %v464 = vpop.f32.mrb[0].mxu0
        %465 = vdwg.mxu0
        %v466 = vmax.f32 %v404, 0.0
        %v467 = vmax.f32 %v407, 0.0
        %v468 = vmax.f32 %v412, 0.0
        %v469 = vmax.f32 %v415, 0.0
        %v470 = vmax.f32 %v420, 0.0
        %v471 = vmax.f32 %v423, 0.0
        %v472 = vmax.f32 %v428, 0.0
        %v473 = vmax.f32 %v431, 0.0
        %v474 = vmax.f32 %v436, 0.0
        %v475 = vmax.f32 %v439, 0.0
        %v476 = vmax.f32 %v444, 0.0
        %v477 = vmax.f32 %v447, 0.0
        %v478 = vmax.f32 %v452, 0.0
        %v479 = vmax.f32 %v455, 0.0
        %v480 = vmax.f32 %v460, 0.0
        %v481 = vmax.f32 %v463, 0.0
        %v482 = vld [vmem:[#allocation2] sm:$0x1]
        %vm483 = vcmask 261120
        %v484 = vsel %vm483, %v466, 0.0
        %v485 = vsel %vm483, %v467, 0.0
        %v486 = vadd.f32 %v484, %v485
        %v487 = vsel %vm483, %v468, 0.0
        %v488 = vadd.f32 %v486, %v487
        %v489 = vsel %vm483, %v469, 0.0
        %v490 = vadd.f32 %v488, %v489
        %v491 = vsel %vm483, %v470, 0.0
        %v492 = vadd.f32 %v490, %v491
        %v493 = vsel %vm483, %v471, 0.0
        %v494 = vadd.f32 %v492, %v493
        %v495 = vsel %vm483, %v472, 0.0
        %v496 = vadd.f32 %v494, %v495
        %v497 = vsel %vm483, %v473, 0.0
        %v498 = vadd.f32 %v496, %v497
        %v499 = vsel %vm483, %v474, 0.0
        %v500 = vadd.f32 %v498, %v499
        %v501 = vsel %vm483, %v475, 0.0
        %v502 = vadd.f32 %v500, %v501
        %v503 = vsel %vm483, %v476, 0.0
        %v504 = vadd.f32 %v502, %v503
        %v505 = vsel %vm483, %v477, 0.0
        %v506 = vadd.f32 %v504, %v505
        %v507 = vsel %vm483, %v478, 0.0
        %v508 = vadd.f32 %v506, %v507
        %v509 = vsel %vm483, %v479, 0.0
        %v510 = vadd.f32 %v508, %v509
        %v511 = vsel %vm483, %v480, 0.0
        %v512 = vadd.f32 %v510, %v511
        %v513 = vsel %vm483, %v481, 0.0
        %v514 = vadd.f32 %v512, %v513
        %v515 = vrot.slane %v514, 4
        %v516 = vadd.f32 %v514, %v515
        %v517 = vrot.slane %v516, 2
        %v518 = vadd.f32 %v516, %v517
        %v519 = vrot.slane %v518, 1
        %v520 = vadd.f32 %v518, %v519
        %v521 = vadd.f32 %v482, %v520
        %vm522 = vcmask 253952
        %523 = vst.msk [vmem:[#allocation2] sm:$0x1] %vm522, %v521
        %p524 = scmp.eq.s32.totalorder %s24, 1
        // Predicated region
        $region45: #{tpu_custom_call.1} parent=39 // pred_check
          %p525 = pneg %p524
        $region46: #{tpu_custom_call.1} parent=39 // pred_check_branch
          %527 = sbr.rel (%p525) target = $region48
        $region47: #{tpu_custom_call.1} parent=39 // pred_region
          %v528 = vld [vmem:[#allocation2] sm:$0x1]
          %v529 = vld [vmem:[%s3] sm:$0xff]
          %v530 = vld [vmem:[%s3 + $0x8] sm:$0xff]
          %v531 = vld [vmem:[%s3 + $0x10] sm:$0xff]
          %v532 = vld [vmem:[%s3 + $0x18] sm:$0xff]
          %v533 = vld [vmem:[%s4] sm:$0x1]
          %v535 = vsel %vm483, %v528, 0
          %537 = vmatprep.subr.mxu0 0.0
          %538 = vmatpush1.msra.mxu0 %v529
          %539 = vmatprep.subr.mxu0 0.0
          %540 = vmatpush1.msra.mxu0 %v530
          %541 = vmatprep.subr.mxu0 0.0
          %542 = vmatpush1.msra.mxu0 %v531
          %543 = vmatprep.subr.mxu0 0.0
          %544 = vmatpush1.msra.mxu0 %v532
          %545 = vmatprep.subr.mxu0 0.0
          %546 = vmatpush1.msra.mxu0 0.0
          %547 = vmatprep.subr.mxu0 0.0
          %548 = vmatpush1.msra.mxu0 0.0
          %549 = vmatprep.subr.mxu0 0.0
          %550 = vmatpush1.msra.mxu0 0.0
          %551 = vmatprep.subr.mxu0 0.0
          %552 = vmatpush1.msra.mxu0 0.0
          %553 = vmatprep.subr.mxu0 0.0
          %554 = vmatpush1.msra.mxu0 0.0
          %555 = vmatprep.subr.mxu0 0.0
          %556 = vmatpush1.msra.mxu0 0.0
          %557 = vmatprep.subr.mxu0 0.0
          %558 = vmatpush1.msra.mxu0 0.0
          %559 = vmatprep.subr.mxu0 0.0
          %560 = vmatpush1.msra.mxu0 0.0
          %561 = vmatprep.subr.mxu0 0.0
          %562 = vmatpush1.msra.mxu0 0.0
          %563 = vmatprep.subr.mxu0 0.0
          %564 = vmatpush1.msra.mxu0 0.0
          %565 = vmatprep.subr.mxu0 0.0
          %566 = vmatpush1.msra.mxu0 0.0
          %567 = vmatprep.subr.mxu0 0.0
          %568 = vmatpush1.msra.mxu0 0.0
          %569 = vmatprep.subr.mxu0 0.0
          %570 = vmatpush1.msra.mxu0 0.0
          %571 = vmatprep.subr.mxu0 0.0
          %572 = vmatpush1.msra.mxu0 0.0
          %573 = vmatprep.subr.mxu0 0.0
          %574 = vmatpush1.msra.mxu0 0.0
          %575 = vmatprep.subr.mxu0 0.0
          %576 = vmatpush1.msra.mxu0 0.0
          %577 = vmatprep.subr.mxu0 0.0
          %578 = vmatpush1.msra.mxu0 0.0
          %579 = vmatprep.subr.mxu0 0.0
          %580 = vmatpush1.msra.mxu0 0.0
          %581 = vmatprep.subr.mxu0 0.0
          %582 = vmatpush1.msra.mxu0 0.0
          %583 = vmatprep.subr.mxu0 0.0
          %584 = vmatpush1.msra.mxu0 0.0
          %585 = vmatprep.subr.mxu0 0.0
          %586 = vmatpush1.msra.mxu0 0.0
          %587 = vmatprep.subr.mxu0 0.0
          %588 = vmatpush1.msra.mxu0 0.0
          %589 = vmatprep.subr.mxu0 0.0
          %590 = vmatpush1.msra.mxu0 0.0
          %591 = vmatprep.subr.mxu0 0.0
          %592 = vmatpush1.msra.mxu0 0.0
          %593 = vmatprep.subr.mxu0 0.0
          %594 = vmatpush1.msra.mxu0 0.0
          %595 = vmatprep.subr.mxu0 0.0
          %596 = vmatpush1.msra.mxu0 0.0
          %597 = vmatprep.subr.mxu0 0.0
          %598 = vmatpush1.msra.mxu0 0.0
          %599 = vmatprep.subr.mxu0 0.0
          %600 = vmatpush1.msra.mxu0 0.0
          %601 = vmatprep.mubr.f32.mxu0 0.0
          %602 = vmatmul.mubr.f32.gmra.mrb[0].mxu0 %v535
          %v603 = vpop.f32.mrb[0].mxu0
          %v604 = vadd.f32 %v533, %v603
          %v605 = vpop.f32.mrb[0].mxu0
          %606 = vdwg.mxu0
          %vm607 = vcmask 73728
          %608 = vst.msk [vmem:[%s239] sm:$0x1] %vm607, %v604
        $region48: #{tpu_custom_call.1} parent=39 // pred_fallthru
          _
        %s609 = sand.u32 %s151, 1
        %s610 = scalar_lea.sflag [#allocation4], %s609
        %s611 = sand.u32 %s151, 1
        %s612 = scalar_lea.vmem [#allocation3], %s611
        // Predicated region
        $region49: #{tpu_custom_call.1} parent=39 // pred_check
          %p613 = pneg %p161
        $region50: #{tpu_custom_call.1} parent=39 // pred_check_branch
          %615 = sbr.rel (%p613) target = $region52
        $region51: #{tpu_custom_call.1} parent=39 // pred_region
          %s617 = ssub.s32 16, 16
          %618 = vsyncadd %s610, %s617
          %s619 = smul.addr %s23, 16
          %s620 = scalar_lea.hbm %s5, %s619
          %s622 = sshll.u32 %s612, 4
          %s623 = int_to_ptr.vmem [resolvable:$true] %s622
          %625 = dma.vmem_to_hbm [thread:$0]  %s623, 16, %s620, %s610
        $region52: #{tpu_custom_call.1} parent=39 // pred_fallthru
          _
      $region40: #{tpu_custom_call.1} parent=5 // pred_fallthru
        _
      %p626 = scmp.le.s32.totalorder 2, %s14
      // Predicated region
      $region53: #{tpu_custom_call.1} parent=5 // pred_check
        %p627 = pneg %p626
      $region54: #{tpu_custom_call.1} parent=5 // pred_check_branch
        %629 = sbr.rel (%p627) target = $region56
      $region55: #{tpu_custom_call.1} parent=5 // pred_region
        %s630 = ssub.s32 %s14, 2
        // Predicated region
        $region57: #{tpu_custom_call.1} parent=55 // pred_check
          %p631 = pneg %p167
        $region58: #{tpu_custom_call.1} parent=55 // pred_check_branch
          %633 = sbr.rel (%p631) target = $region60
        $region59: #{tpu_custom_call.1} parent=55 // pred_region
          %s634 = sand.u32 %s152, 1
          %s635 = scalar_lea.sflag [#allocation4], %s634
          %s636 = sand.u32 %s152, 1
          %s637 = scalar_lea.vmem [#allocation3], %s636
          %638 = dma.done %s635, 16
        $region60: #{tpu_custom_call.1} parent=55 // pred_fallthru
          _
      $region56: #{tpu_custom_call.1} parent=5 // pred_fallthru
        _
    $region6: #{tpu_custom_call.1} parent=1 // loop_footer
      %s18 = sadd.s32 1, %s14
    $region7: #{tpu_custom_call.1} parent=1 // loop_footer_branch
      %13 = sbr.rel target = $region3
    $region8: #{tpu_custom_call.1} parent=1 // loop_exit
      _
    %639 = vsyncpa [#allocation4], 1
    %s640 = scalar_lea.sflag [#allocation4], 1
    %641 = vsyncpa %s640, 1

</llo_original>
